<compile_context>
chip_gen: v6e
topology: v6e:2x2x1
jax: 0.10.0
libtpu: 0.0.40
codegen_flags: <defaults>
</compile_context>

<pallas_src>
import functools
import math

import jax
import jax.numpy as jnp
from jax import lax
from jax.experimental import pallas as pl
from jax.experimental.pallas import tpu as pltpu

# ----------------------------- configuration ------------------------------
CORR_RADIUS = 2          # corr_radius (kept small for the demo)
CORR_CHANNELS = 16       # corr_channels
CDIM = 32                # context_channels
HDIM = 32                # recurrent_channels
MNET_DIM = 24            # matching-net hidden width
MOTION_DIM = 64          # motion-encoder output width (incl. 2 flow channels)
DISP = (2 * CORR_RADIUS + 1) ** 2

sg = lax.stop_gradient


def _round_up(x, m):
    return ((x + m - 1) // m) * m


# --------------------------- Pallas GEMM kernel ----------------------------
# Single-pass GEMM + bias + activation.  bf16 operands, f32 accumulation via
# preferred_element_type, f32 epilogue.  K is loaded as one full-dim block
# (max K ~ 900 here), so there is no accumulator scratch and no k-grid.
def _gemm_kernel(x_ref, w_ref, b_ref, o_ref, *, act):
    y = jnp.dot(x_ref[...], w_ref[...], preferred_element_type=jnp.float32)
    y = y + b_ref[...]
    if act == "relu":
        y = jnp.maximum(y, 0.0)
    elif act == "tanh":
        y = jnp.tanh(y)
    elif act == "sigmoid":
        y = jax.nn.sigmoid(y)
    o_ref[...] = y


@functools.lru_cache(maxsize=None)
def _gemm_call(Mp, Kp, Np, TM, act):
    kernel = functools.partial(_gemm_kernel, act=act)
    return pl.pallas_call(
        kernel,
        out_shape=jax.ShapeDtypeStruct((Mp, Np), jnp.float32),
        grid_spec=pltpu.PrefetchScalarGridSpec(
            num_scalar_prefetch=0,
            grid=(Mp // TM,),
            in_specs=[
                pl.BlockSpec((TM, Kp), lambda i: (i, 0)),
                pl.BlockSpec((Kp, Np), lambda i: (0, 0)),
                pl.BlockSpec((1, Np), lambda i: (0, 0)),
            ],
            out_specs=pl.BlockSpec((TM, Np), lambda i: (i, 0)),
        ),
        compiler_params=pltpu.CompilerParams(
            dimension_semantics=("parallel",),
            vmem_limit_bytes=32 * 1024 * 1024),
    )


def _pick_tm(M):
    """Adaptive M-tile: big tiles for big GEMMs (amortize per-step overhead),
    exact-sized single tile for the tiny coarse-pyramid GEMMs."""
    if M >= 2048:
        return 512
    if M >= 512:
        return 256
    if M >= 128:
        return 128
    return _round_up(max(M, 16), 16)


def _gemm(xm, p, act="none"):
    """xm:(M,K) f32/bf16, p: prepared conv params -> act(xm @ w + b) f32."""
    M, K = xm.shape
    Kp, Np = p["Kp"], p["Np"]
    TM = _pick_tm(M)
    Mp = _round_up(M, TM)
    xq = xm.astype(jnp.bfloat16)
    if Mp != M or Kp != K:
        xq = jnp.pad(xq, ((0, Mp - M), (0, Kp - K)))   # pads are exact zeros
    y = _gemm_call(Mp, Kp, Np, TM, act)(xq, p["wq"], p["bq"])
    return y[:M, :p["cout"]]


# ----------------------------- weight prep ----------------------------------
def prep_conv(w, b):
    """Pad + cast conv weights once at init: w (kh,kw,cin,cout) -> (Kp,Np) bf16,
    b -> (1,Np) f32.  Zero pads (cast after pad) keep the GEMM exact."""
    kh, kw, cin, cout = w.shape
    K = kh * kw * cin
    Kp, Np = _round_up(K, 128), _round_up(cout, 128)
    wq = jnp.pad(w.reshape(K, cout),
                 ((0, Kp - K), (0, Np - cout))).astype(jnp.bfloat16)
    bq = jnp.pad(b, (0, Np - cout)).astype(jnp.float32).reshape(1, Np)
    return {"wq": wq, "bq": bq, "kh": kh, "kw": kw, "cin": cin,
            "cout": cout, "Kp": Kp, "Np": Np}


# ------------------------------ conv helpers --------------------------------
def _im2col(x, kh, kw, stride, ph, pw):
    B, H, W, C = x.shape
    xp = jnp.pad(x, ((0, 0), (ph, ph), (pw, pw), (0, 0)))
    oh = (H + 2 * ph - kh) // stride + 1
    ow = (W + 2 * pw - kw) // stride + 1
    cols = []
    for i in range(kh):
        for j in range(kw):
            cols.append(xp[:, i:i + stride * (oh - 1) + 1:stride,
                           j:j + stride * (ow - 1) + 1:stride, :])
    return jnp.concatenate(cols, axis=-1), oh, ow


def conv2d(x, p, stride=1, act="none"):
    """NHWC conv, 'same' padding (PyTorch padding=k//2), fused bias+act GEMM."""
    B, H, W, _ = x.shape
    kh, kw, cin, cout = p["kh"], p["kw"], p["cin"], p["cout"]
    xb = x.astype(jnp.bfloat16)
    if kh == 1 and kw == 1 and stride == 1:
        cols, oh, ow = xb.reshape(B * H * W, cin), H, W
    else:
        cols4, oh, ow = _im2col(xb, kh, kw, stride, kh // 2, kw // 2)
        cols = cols4.reshape(-1, kh * kw * cin)
    y = _gemm(cols, p, act)
    return y.reshape(B, oh, ow, cout)


# ----------------------------- JAX-glue pieces -------------------------------
def coord_grid(b, h, w):
    ys, xs = jnp.meshgrid(jnp.arange(h, dtype=jnp.float32),
                          jnp.arange(w, dtype=jnp.float32), indexing="ij")
    g = jnp.stack([xs, ys], axis=-1)            # (H,W,2) with (x,y)
    return jnp.broadcast_to(g, (b, h, w, 2))


def interp_bilinear(im, oh, ow):
    """F.interpolate(..., mode='bilinear', align_corners=True) on NHWC."""
    B, H, W, C = im.shape
    ys = jnp.linspace(0.0, float(H - 1), oh)
    xs = jnp.linspace(0.0, float(W - 1), ow)
    y0 = jnp.floor(ys).astype(jnp.int32)
    x0 = jnp.floor(xs).astype(jnp.int32)
    y1 = jnp.minimum(y0 + 1, H - 1)
    x1 = jnp.minimum(x0 + 1, W - 1)
    wy = (ys - y0.astype(jnp.float32))[None, :, None, None]
    wx = (xs - x0.astype(jnp.float32))[None, None, :, None]

    def g(yi, xi):
        return im[:, yi][:, :, xi]

    return ((1 - wy) * (1 - wx) * g(y0, x0) + (1 - wy) * wx * g(y0, x1) +
            wy * (1 - wx) * g(y1, x0) + wy * wx * g(y1, x1))


def bilinear_warp(img, coords):
    """grid_sample-style warp (zeros padding). coords[...,0]=x, coords[...,1]=y."""
    B, H, W, C = img.shape
    x, y = coords[..., 0], coords[..., 1]
    x0f, y0f = jnp.floor(x), jnp.floor(y)
    wx, wy = x - x0f, y - y0f
    bidx = jnp.arange(B)[:, None, None]

    def sample(xf, yf):
        valid = (xf >= 0) & (xf <= W - 1) & (yf >= 0) & (yf <= H - 1)
        xi = jnp.clip(xf, 0, W - 1).astype(jnp.int32)
        yi = jnp.clip(yf, 0, H - 1).astype(jnp.int32)
        return img[bidx, yi, xi] * valid[..., None].astype(img.dtype)

    return ((1 - wx)[..., None] * (1 - wy)[..., None] * sample(x0f, y0f) +
            wx[..., None] * (1 - wy)[..., None] * sample(x0f + 1, y0f) +
            (1 - wx)[..., None] * wy[..., None] * sample(x0f, y0f + 1) +
            wx[..., None] * wy[..., None] * sample(x0f + 1, y0f + 1))


# ------------------------------ model blocks --------------------------------
def encoder(p, x):
    y = conv2d(x, p["c0"], stride=2, act="relu")      # 1/2
    y = conv2d(y, p["c1"], stride=2, act="relu")      # 1/4
    y3 = conv2d(y, p["c2"], stride=2, act="relu")     # 1/8
    y4 = conv2d(y3, p["c3"], stride=2, act="relu")    # 1/16
    y5 = conv2d(y4, p["c4"], stride=2, act="relu")    # 1/32
    y6 = conv2d(y5, p["c5"], stride=2, act="relu")    # 1/64
    return {3: conv2d(y3, p["h3"]), 4: conv2d(y4, p["h4"]),
            5: conv2d(y5, p["h5"]), 6: conv2d(y6, p["h6"])}


def corr_dicl(p, f1, f2, coords, radius, dap=True):
    """DICL correlation: warp f2 to coords, build (2r+1)^2 displacement volume,
    run matching net per displacement, then DAP (1x1, identity init)."""
    B, H, W, C = f1.shape
    d = 2 * radius + 1
    f2w = bilinear_warp(f2, coords)
    # build the displacement volume in bf16 (it goes straight into bf16 GEMMs)
    f1b = f1.astype(jnp.bfloat16)
    f2p = jnp.pad(f2w.astype(jnp.bfloat16),
                  ((0, 0), (radius, radius), (radius, radius), (0, 0)))
    vols = []
    for di in range(d):
        for dj in range(d):
            vols.append(jnp.concatenate(
                [f1b, f2p[:, di:di + H, dj:dj + W, :]], axis=-1))
    vol = jnp.stack(vols, axis=1).reshape(B * d * d, H, W, 2 * C)
    c = conv2d(vol, p["m1"], act="relu")
    c = conv2d(c, p["m2"], act="relu")
    c = conv2d(c, p["m3"], act="none")                 # (B*d*d, H, W, 1)
    cost = jnp.transpose(c.reshape(B, d * d, H, W), (0, 2, 3, 1))
    if dap:
        # DAP is a 25x25 1x1 conv (identity init): keep it on the VPU instead
        # of padding K=N=25 up to 128 on the MXU path.
        cost = jnp.einsum("bhwd,de->bhwe", cost, p["dap_w"]) + p["dap_b"]
    return cost


def _gru_pass(p, h, x):
    hx = jnp.concatenate([h, x], axis=-1)
    zr = conv2d(hx, p["zr"], act="sigmoid")        # fused z|r projection
    z, r = zr[..., :HDIM], zr[..., HDIM:]
    q = conv2d(jnp.concatenate([r * h, x], axis=-1), p["q"], act="tanh")
    return (1.0 - z) * h + z * q


def update_block(p, h, ctx, corr, flow):
    """BasicUpdateBlock: motion encoder -> SepConvGRU -> flow head."""
    c = conv2d(corr, p["cc1"], act="relu")
    c = conv2d(c, p["cc2"], act="relu")
    f = conv2d(flow, p["cf1"], act="relu")
    f = conv2d(f, p["cf2"], act="relu")
    m = conv2d(jnp.concatenate([c, f], axis=-1), p["cm"], act="relu")
    motion = jnp.concatenate([m, flow], axis=-1)
    x = jnp.concatenate([ctx, motion], axis=-1)
    h = _gru_pass(p["gru_h"], h, x)     # horizontal (1x5)
    h = _gru_pass(p["gru_v"], h, x)     # vertical   (5x1)
    d1 = conv2d(h, p["fh1"], act="relu")
    delta = conv2d(d1, p["fh2"], act="none")
    return h, delta


def up8net(p, h, flow):
    """Up8Network: predict convex-combination mask and upsample flow 8x."""
    m = conv2d(h, p["u1"], act="relu")
    mask = conv2d(m, p["u2"], act="none") * 0.25       # (B,H,W,8*8*9)
    B, H, W, _ = mask.shape
    mask = jax.nn.softmax(mask.reshape(B, H, W, 9, 8, 8), axis=3)
    fp = jnp.pad(8.0 * flow, ((0, 0), (1, 1), (1, 1), (0, 0)))
    patches = jnp.stack([fp[:, i:i + H, j:j + W, :]
                         for i in range(3) for j in range(3)], axis=3)
    up = jnp.einsum("bhwkde,bhwkc->bhwdec", mask, patches)  # (B,H,W,8,8,2)
    return up.transpose(0, 1, 3, 2, 4, 5).reshape(B, 8 * H, 8 * W, 2)


# ------------------------------ parameters ----------------------------------
def init_params(key):
    keys = iter(jax.random.split(key, 128))

    def rw(kh, kw, cin, cout):
        return jax.random.normal(next(keys), (kh, kw, cin, cout),
                                 jnp.float32) / math.sqrt(kh * kw * cin)

    def cv(kh, kw, cin, cout):
        return prep_conv(rw(kh, kw, cin, cout), jnp.zeros((cout,), jnp.float32))

    def enc(out_ch):
        return {"c0": cv(7, 7, 3, 16), "c1": cv(3, 3, 16, 24),
                "c2": cv(3, 3, 24, 32), "c3": cv(3, 3, 32, 32),
                "c4": cv(3, 3, 32, 32), "c5": cv(3, 3, 32, 32),
                "h3": cv(1, 1, 32, out_ch), "h4": cv(1, 1, 32, out_ch),
                "h5": cv(1, 1, 32, out_ch), "h6": cv(1, 1, 32, out_ch)}

    def corr_p():
        return {"m1": cv(3, 3, 2 * CORR_CHANNELS, MNET_DIM),
                "m2": cv(3, 3, MNET_DIM, MNET_DIM),
                "m3": cv(3, 3, MNET_DIM, 1),
                # DAP 1x1 conv, dap_init='identity' (applied on the VPU)
                "dap_w": jnp.eye(DISP, dtype=jnp.float32),
                "dap_b": jnp.zeros((DISP,), jnp.float32)}

    def gru(kh, kw, cin):
        # z and r projections share their input -> fuse into one GEMM (N=64)
        wz, wr = rw(kh, kw, cin, HDIM), rw(kh, kw, cin, HDIM)
        return {"zr": prep_conv(jnp.concatenate([wz, wr], axis=-1),
                                jnp.zeros((2 * HDIM,), jnp.float32)),
                "q": cv(kh, kw, cin, HDIM)}

    xdim = CDIM + MOTION_DIM
    upd = {"cc1": cv(1, 1, DISP, 96), "cc2": cv(3, 3, 96, 64),
           "cf1": cv(7, 7, 2, 64), "cf2": cv(3, 3, 64, 32),
           "cm": cv(3, 3, 96, MOTION_DIM - 2),
           "gru_h": gru(1, 5, HDIM + xdim),
           "gru_v": gru(5, 1, HDIM + xdim),
           "fh1": cv(3, 3, HDIM, 96), "fh2": cv(3, 3, 96, 2)}

    return {"fnet": enc(CORR_CHANNELS),
            "cnet": enc(HDIM + CDIM),
            "corr": {l: corr_p() for l in (3, 4, 5, 6)},   # share_dicl=False
            "update": upd,                                  # share_rnn=True
            "upnet": {"u1": cv(3, 3, HDIM, 64), "u2": cv(1, 1, 64, 64 * 9)}}


# ------------------------------- forward ------------------------------------
def forward(params, img1_nchw, img2_nchw, iterations=(3, 4, 4, 3),
            dap=True, upnet=True):
    img1 = jnp.transpose(img1_nchw, (0, 2, 3, 1))   # NCHW -> NHWC
    img2 = jnp.transpose(img2_nchw, (0, 2, 3, 1))
    b, h, w, _ = img1.shape

    f1 = encoder(params["fnet"], img1)
    f2 = encoder(params["fnet"], img2)
    ctx = encoder(params["cnet"], img1)

    hs, cxs = {}, {}
    for l in (3, 4, 5, 6):
        hs[l] = jnp.tanh(ctx[l][..., :HDIM])
        cxs[l] = jax.nn.relu(ctx[l][..., HDIM:])

    def run_level(l, coords0, coords1, flow, n_iter, final=False):
        outs = []
        for _ in range(n_iter):
            coords1 = sg(coords1)
            corr = corr_dicl(params["corr"][l], f1[l], f2[l], coords1,
                             CORR_RADIUS, dap=dap)
            hs[l], d = update_block(params["update"], hs[l], cxs[l],
                                    corr, sg(flow))
            coords1 = coords1 + d
            flow = coords1 - coords0
            if final:
                if upnet:
                    outs.append(up8net(params["upnet"], hs[l], flow))
                else:
                    outs.append(8.0 * interp_bilinear(flow, h, w))
            else:
                outs.append(flow)
        return outs, flow

    # level 6 (1/64)
    coords0 = coord_grid(b, h // 64, w // 64)
    coords1 = coords0
    flow = coords1 - coords0
    out_6, flow = run_level(6, coords0, coords1, flow, iterations[0])

    # level 5 (1/32)
    flow = 2.0 * interp_bilinear(flow, h // 32, w // 32)
    coords0 = coord_grid(b, h // 32, w // 32)
    coords1 = coords0 + flow
    # upsample_hidden='none' -> hidden state passes through unchanged
    out_5, flow = run_level(5, coords0, coords1, flow, iterations[1])

    # level 4 (1/16)
    flow = 2.0 * interp_bilinear(flow, h // 16, w // 16)
    coords0 = coord_grid(b, h // 16, w // 16)
    coords1 = coords0 + flow
    out_4, flow = run_level(4, coords0, coords1, flow, iterations[2])

    # level 3 (1/8) with full-resolution upsampling of each output
    flow = 2.0 * interp_bilinear(flow, h // 8, w // 8)
    coords0 = coord_grid(b, h // 8, w // 8)
    coords1 = coords0 + flow
    out_3, flow = run_level(3, coords0, coords1, flow, iterations[3],
                            final=True)

    to_nchw = lambda x: jnp.transpose(x, (0, 3, 1, 2))
    return ([to_nchw(o) for o in out_6], [to_nchw(o) for o in out_5],
            [to_nchw(o) for o in out_4], [to_nchw(o) for o in out_3])


# --------------------------------- main --------------------------------------
if __name__ == "__main__":
    key = jax.random.PRNGKey(0)
    kp, k1, k2 = jax.random.split(key, 3)
    params = init_params(kp)

    # small inputs (PyTorch NCHW convention); 128x128 so the 1/64 level is 2x2
    img1 = jax.random.normal(k1, (2, 3, 128, 128), jnp.float32)
    img2 = jax.random.normal(k2, (2, 3, 128, 128), jnp.float32)

    out_6, out_5, out_4, out_3 = forward(params, img1, img2)

    for group in (out_6, out_5, out_4, out_3):
        for o in group:
            jax.block_until_ready(o)

    assert out_6[-1].shape == (2, 2, 2, 2)
    assert out_5[-1].shape == (2, 2, 4, 4)
    assert out_4[-1].shape == (2, 2, 8, 8)
    assert out_3[-1].shape == (2, 2, 128, 128)
    print("KERNEL_OK")
</pallas_src>

<mosaic_0001>
module attributes {stable_mosaic.version = 11 : i64} {
  func.func @_gemm_kernel(%arg0: i32, %arg1: memref<512x256xbf16, #tpu.memory_space<vmem>>, %arg2: memref<256x128xbf16, #tpu.memory_space<vmem>>, %arg3: memref<1x128xf32, #tpu.memory_space<vmem>>, %arg4: memref<512x128xf32, #tpu.memory_space<vmem>>) attributes {dimension_semantics = [#tpu.dimension_semantics<parallel>], iteration_bounds = array<i64: 16>, scalar_prefetch = 0 : i64, scratch_operands = 0 : i64, tpu.core_type = #tpu.core_type<tc>, window_params = [{transform_indices = @transform_0, window_bounds = array<i64: 512, 256>}, {pipeline_mode = #tpu.pipeline_mode<synchronous>, transform_indices = @transform_1, window_bounds = array<i64: 256, 128>}, {pipeline_mode = #tpu.pipeline_mode<synchronous>, transform_indices = @transform_2, window_bounds = array<i64: 1, 128>}, {transform_indices = @transform_3, window_bounds = array<i64: 512, 128>}]} {
    %c0 = arith.constant 0 : index
    %c0_0 = arith.constant 0 : index
    %0 = vector.load %arg1[%c0, %c0_0] : memref<512x256xbf16, #tpu.memory_space<vmem>>, vector<512x256xbf16>
    %c0_1 = arith.constant 0 : index
    %c0_2 = arith.constant 0 : index
    %1 = vector.load %arg2[%c0_1, %c0_2] : memref<256x128xbf16, #tpu.memory_space<vmem>>, vector<256x128xbf16>
    %cst = arith.constant dense<0.000000e+00> : vector<512x128xf32>
    %2 = tpu.matmul %0, %1, %cst {dimension_numbers = #tpu.dot_dimension_numbers<[1], [0], [0], [1], [0, 0, 1, 1], [], []>} : vector<512x256xbf16>, vector<256x128xbf16>, vector<512x128xf32> -> vector<512x128xf32>
    %c0_3 = arith.constant 0 : index
    %c0_4 = arith.constant 0 : index
    %3 = vector.load %arg3[%c0_3, %c0_4] : memref<1x128xf32, #tpu.memory_space<vmem>>, vector<1x128xf32>
    %4 = vector.broadcast %3 : vector<1x128xf32> to vector<512x128xf32>
    %5 = arith.addf %2, %4 : vector<512x128xf32>
    %cst_5 = arith.constant 0.000000e+00 : f32
    %6 = vector.broadcast %cst_5 : f32 to vector<512x128xf32>
    %7 = arith.maximumf %5, %6 : vector<512x128xf32>
    %c0_6 = arith.constant 0 : index
    %c0_7 = arith.constant 0 : index
    %8 = vector.load %arg4[%c0_6, %c0_7] : memref<512x128xf32, #tpu.memory_space<vmem>>, vector<512x128xf32>
    tpu.vector_store %arg4[%c0_6, %c0_7], %7 {strides = array<i32>} : memref<512x128xf32, #tpu.memory_space<vmem>>, vector<512x128xf32>,
    return
  }
  func.func @transform_0(%arg0: i32) -> (i32, i32) {
    %c0_i32 = arith.constant 0 : i32
    %c0_i32_0 = arith.constant 0 : i32
    return %arg0, %c0_i32 : i32, i32
  }
  func.func @transform_1(%arg0: i32) -> (i32, i32) {
    %c0_i32 = arith.constant 0 : i32
    %c0_i32_0 = arith.constant 0 : i32
    %c0_i32_1 = arith.constant 0 : i32
    return %c0_i32, %c0_i32_0 : i32, i32
  }
  func.func @transform_2(%arg0: i32) -> (i32, i32) {
    %c0_i32 = arith.constant 0 : i32
    %c0_i32_0 = arith.constant 0 : i32
    %c0_i32_1 = arith.constant 0 : i32
    return %c0_i32, %c0_i32_0 : i32, i32
  }
  func.func @transform_3(%arg0: i32) -> (i32, i32) {
    %c0_i32 = arith.constant 0 : i32
    %c0_i32_0 = arith.constant 0 : i32
    return %arg0, %c0_i32 : i32, i32
  }
}

</mosaic_0001>

<llo_original>
// kernel: tpu_custom_call.1
$region0: #{tpu_custom_call.1}
  #allocation0 [shape = 'u32[]', space=smem, size = 0x4, offset = 0x4, fixed_abs, tag = 'smem constant byte address 0x4 - core index']
  #allocation1 [shape = 'u32[144,128]{1,0:T(1,128)}', space=vmem, size = 0x12000, scoped, tag = 'internal scratch']
  %s0 = inlined_call_operand.hbm [shape: bf16[8192,256], index: 0, kind: input, shape index: {}]
  %s1 = inlined_call_operand.hbm [shape: bf16[256,128], index: 1, kind: input, shape index: {}]
  %s2 = inlined_call_operand.hbm [shape: f32[1,128], index: 2, kind: input, shape index: {}]
  %s3 = inlined_call_operand.hbm [shape: f32[8192,128], index: 3, kind: output, shape index: {}]
  %s4 = sld [smem:[#allocation0]]
  $region57: #{tpu_custom_call.1} parent=0
    _
  %s6 = ssub.s32 1, %s4
  %s7 = scalar_select 0, %s6, %s4
  $region1: #{tpu_custom_call.1} parent=0
    #allocation2 [shape = 'u8[524288]{0}', space=vmem, size = 0x80000, scoped, tag = 'input window, operand 0']
    #allocation3 [shape = 's32[2]{0}', space=sflag, size = 0x8, scoped, tag = 'scoped memory for tpu_custom_call.1']
    #allocation4 [shape = 's32[2]{0}', space=sflag, size = 0x8, scoped, tag = 'scoped memory for tpu_custom_call.1']
    #allocation5 [shape = 'u8[65536]{0}', space=vmem, size = 0x10000, scoped, tag = 'input window, operand 1, single buffered']
    #allocation6 [shape = 's32[1]{0}', space=sflag, size = 0x4, scoped, tag = 'scoped memory for tpu_custom_call.1']
    #allocation7 [shape = 'u8[512]{0}', space=vmem, size = 0x400, scoped, tag = 'input window, operand 2, single buffered']
    #allocation8 [shape = 'u8[524288]{0}', space=vmem, size = 0x80000, scoped, tag = 'output window, operand 0']
    %8 = vsyncpa [#allocation3], 0
    %s9 = scalar_lea.sflag [#allocation3], 1
    %10 = vsyncpa %s9, 0
    %11 = vsyncpa [#allocation6], 0
    %12 = vsyncpa [#allocation4], 0
    %s13 = scalar_lea.sflag [#allocation4], 1
    %14 = vsyncpa %s13, 0
    loop: start=0, step=1, limit=18
    $region2: #{tpu_custom_call.1} parent=1 // loop_pre_header
      _
    $region3: #{tpu_custom_call.1} parent=1 // loop_header
      %s16 = sphi 0, %s20
      %p17 = scmp.ge.s32.totalorder %s16, 18
      %s26 = sphi 0, %s28
      %s29 = sphi 0, %s26
      %s30 = sphi 0, %s29
      %s46 = sphi 0, %s30
      %s50 = sphi 0, %s50
      %s52 = sphi 0, %s50
      %s53 = sphi 0, %s52
      %s67 = sphi 0, %s53
      %s71 = sphi 0, %s71
      %s73 = sphi 0, %s71
      %s74 = sphi 0, %s73
      %s88 = sphi 0, %s74
      %s94 = sphi 0, %s96
      %s97 = sphi 0, %s94
      %s98 = sphi 0, %s97
      %s114 = sphi 0, %s98
    $region4: #{tpu_custom_call.1} parent=1 // loop_header_branch
      %19 = sbr.rel (%p17) target = $region8
    $region5: #{tpu_custom_call.1} parent=1 // loop_body
      %s21 = ssub.s32 %s16, 1
      %s22 = ssub.s32 %s16, 2
      %s23 = sadd.s32 %s16, 1
      %s24 = ssub.s32 %s16, %s23
      %p25 = scmp.eq.s32.totalorder %s24, 0
      %s27 = sadd.s32 %s26, 1
      %s28 = scalar_select %p25, %s26, %s27
      %p31 = pneg %p25
      %p32 = scmp.eq.s32.totalorder %s16, 15
      %p33 = por %p31, %p32
      %p34 = scmp.ne.s32.totalorder %s26, %s29
      %p35 = scmp.eq.s32.totalorder %s16, 0
      %p36 = por %p34, %p35
      %p37 = scmp.ne.s32.totalorder %s26, %s29
      %p38 = scmp.eq.s32.totalorder %s21, 15
      %p39 = por %p37, %p38
      %p40 = scmp.ne.s32.totalorder %s29, %s30
      %p41 = scmp.eq.s32.totalorder %s21, 0
      %p42 = por %p40, %p41
      %p43 = scmp.ne.s32.totalorder %s29, %s30
      %p44 = scmp.eq.s32.totalorder %s22, 15
      %p45 = por %p43, %p44
      %p47 = scmp.ne.s32.totalorder %s30, %s46
      %p48 = scmp.eq.s32.totalorder %s22, 0
      %p49 = por %p47, %p48
      %s51 = sadd.s32 %s50, 1
      %p54 = scmp.eq.s32.totalorder %s16, 15
      %p55 = scmp.ne.s32.totalorder %s50, %s52
      %p56 = scmp.eq.s32.totalorder %s16, 0
      %p57 = por %p55, %p56
      %p58 = scmp.ne.s32.totalorder %s50, %s52
      %p59 = scmp.eq.s32.totalorder %s21, 15
      %p60 = por %p58, %p59
      %p61 = scmp.ne.s32.totalorder %s52, %s53
      %p62 = scmp.eq.s32.totalorder %s21, 0
      %p63 = por %p61, %p62
      %p64 = scmp.ne.s32.totalorder %s52, %s53
      %p65 = scmp.eq.s32.totalorder %s22, 15
      %p66 = por %p64, %p65
      %p68 = scmp.ne.s32.totalorder %s53, %s67
      %p69 = scmp.eq.s32.totalorder %s22, 0
      %p70 = por %p68, %p69
      %s72 = sadd.s32 %s71, 1
      %p75 = scmp.eq.s32.totalorder %s16, 15
      %p76 = scmp.ne.s32.totalorder %s71, %s73
      %p77 = scmp.eq.s32.totalorder %s16, 0
      %p78 = por %p76, %p77
      %p79 = scmp.ne.s32.totalorder %s71, %s73
      %p80 = scmp.eq.s32.totalorder %s21, 15
      %p81 = por %p79, %p80
      %p82 = scmp.ne.s32.totalorder %s73, %s74
      %p83 = scmp.eq.s32.totalorder %s21, 0
      %p84 = por %p82, %p83
      %p85 = scmp.ne.s32.totalorder %s73, %s74
      %p86 = scmp.eq.s32.totalorder %s22, 15
      %p87 = por %p85, %p86
      %p89 = scmp.ne.s32.totalorder %s74, %s88
      %p90 = scmp.eq.s32.totalorder %s22, 0
      %p91 = por %p89, %p90
      %s92 = ssub.s32 %s16, %s23
      %p93 = scmp.eq.s32.totalorder %s92, 0
      %s95 = sadd.s32 %s94, 1
      %s96 = scalar_select %p93, %s94, %s95
      %p99 = pneg %p93
      %p100 = scmp.eq.s32.totalorder %s16, 15
      %p101 = por %p99, %p100
      %p102 = scmp.ne.s32.totalorder %s94, %s97
      %p103 = scmp.eq.s32.totalorder %s16, 0
      %p104 = por %p102, %p103
      %p105 = scmp.ne.s32.totalorder %s94, %s97
      %p106 = scmp.eq.s32.totalorder %s21, 15
      %p107 = por %p105, %p106
      %p108 = scmp.ne.s32.totalorder %s97, %s98
      %p109 = scmp.eq.s32.totalorder %s21, 0
      %p110 = por %p108, %p109
      %p111 = scmp.ne.s32.totalorder %s97, %s98
      %p112 = scmp.eq.s32.totalorder %s22, 15
      %p113 = por %p111, %p112
      %p115 = scmp.ne.s32.totalorder %s98, %s114
      %p116 = scmp.eq.s32.totalorder %s22, 0
      %p117 = por %p115, %p116
      %p118 = scmp.le.s32.totalorder 1, %s16
      %p119 = scmp.lt.s32.totalorder %s16, 17
      %p120 = pnand %p118, %p119
      %p121 = pneg %p120
      // Predicated region
      $region9: #{tpu_custom_call.1} parent=5 // pred_check
        _
      $region10: #{tpu_custom_call.1} parent=5 // pred_check_branch
        %123 = sbr.rel (%p120) target = $region12
      $region11: #{tpu_custom_call.1} parent=5 // pred_region
        %s124 = ssub.s32 %s16, 1
        // Predicated region
        $region13: #{tpu_custom_call.1} parent=11 // pred_check
          %p125 = pneg %p63
        $region14: #{tpu_custom_call.1} parent=11 // pred_check_branch
          %127 = sbr.rel (%p125) target = $region16
        $region15: #{tpu_custom_call.1} parent=11 // pred_region
          %s129 = ssub.s32 2048, 2048
          %130 = vsyncadd [#allocation6], %s129
          %s131 = sshll.u32 [#allocation5], 4
          %s132 = int_to_ptr.vmem [resolvable:$true] %s131
          %137 = dma.hbm_to_vmem [thread:$0]  %s1, 2048, %s132, [#allocation6], 64, 64, 4
        $region16: #{tpu_custom_call.1} parent=11 // pred_fallthru
          _
        // Predicated region
        $region17: #{tpu_custom_call.1} parent=11 // pred_check
          %p138 = pneg %p84
        $region18: #{tpu_custom_call.1} parent=11 // pred_check_branch
          %140 = sbr.rel (%p138) target = $region20
        $region19: #{tpu_custom_call.1} parent=11 // pred_region
          %s142 = ssub.s32 16, 16
          %143 = vsyncadd [#allocation6], %s142
          %s145 = sshll.u32 [#allocation7], 4
          %s146 = int_to_ptr.vmem [resolvable:$true] %s145
          %148 = dma.hbm_to_vmem [thread:$0]  %s2, 16, %s146, [#allocation6]
        $region20: #{tpu_custom_call.1} parent=11 // pred_fallthru
          _
      $region12: #{tpu_custom_call.1} parent=5 // pred_fallthru
        _
      %p149 = scmp.lt.s32.totalorder %s16, 16
      // Predicated region
      $region21: #{tpu_custom_call.1} parent=5 // pred_check
        %p150 = pneg %p149
      $region22: #{tpu_custom_call.1} parent=5 // pred_check_branch
        %152 = sbr.rel (%p150) target = $region24
      $region23: #{tpu_custom_call.1} parent=5 // pred_region
        // Predicated region
        $region25: #{tpu_custom_call.1} parent=23 // pred_check
          %p153 = pneg %p36
        $region26: #{tpu_custom_call.1} parent=23 // pred_check_branch
          %155 = sbr.rel (%p153) target = $region28
        $region27: #{tpu_custom_call.1} parent=23 // pred_region
          %s156 = sand.u32 %s26, 1
          %s157 = scalar_lea.sflag [#allocation3], %s156
          %s158 = sand.u32 %s26, 1
          %s159 = smul.addr %s158, 512
          %s160 = scalar_lea.vmem [#allocation2], %s159
          %s161 = smul.u32 64, %s16
          %s163 = ssub.s32 8192, 8192
          %164 = vsyncadd %s157, %s163
          %s165 = smul.addr %s161, 2
          %s166 = smul.addr %s165, 64
          %s167 = scalar_lea.hbm %s0, %s166
          %s168 = sshll.u32 %s160, 4
          %s169 = int_to_ptr.vmem [resolvable:$true] %s168
          %174 = dma.hbm_to_vmem [thread:$0]  %s167, 8192, %s169, %s157, 128, 128, 8
        $region28: #{tpu_custom_call.1} parent=23 // pred_fallthru
          _
      $region24: #{tpu_custom_call.1} parent=5 // pred_fallthru
        _
      %p175 = scmp.le.s32.totalorder 1, %s16
      %p176 = scmp.lt.s32.totalorder %s16, 17
      %p177 = pnand %p175, %p176
      %p178 = pneg %p177
      // Predicated region
      $region29: #{tpu_custom_call.1} parent=5 // pred_check
        _
      $region30: #{tpu_custom_call.1} parent=5 // pred_check_branch
        %180 = sbr.rel (%p177) target = $region32
      $region31: #{tpu_custom_call.1} parent=5 // pred_region
        %s181 = ssub.s32 %s16, 1
        %s182 = sand.u32 %s29, 1
        %s183 = scalar_lea.sflag [#allocation3], %s182
        %s184 = sand.u32 %s29, 1
        %s185 = smul.addr %s184, 512
        %s186 = scalar_lea.vmem [#allocation2], %s185
        // Predicated region
        $region33: #{tpu_custom_call.1} parent=31 // pred_check
          %p187 = pneg %p42
        $region34: #{tpu_custom_call.1} parent=31 // pred_check_branch
          %189 = sbr.rel (%p187) target = $region36
        $region35: #{tpu_custom_call.1} parent=31 // pred_region
          %190 = dma.done %s183, 8192
        $region36: #{tpu_custom_call.1} parent=31 // pred_fallthru
          _
        // Predicated region
        $region37: #{tpu_custom_call.1} parent=31 // pred_check
          %p191 = pneg %p63
        $region38: #{tpu_custom_call.1} parent=31 // pred_check_branch
          %193 = sbr.rel (%p191) target = $region40
        $region39: #{tpu_custom_call.1} parent=31 // pred_region
          %194 = dma.done [#allocation6], 2048
        $region40: #{tpu_custom_call.1} parent=31 // pred_fallthru
          _
        // Predicated region
        $region41: #{tpu_custom_call.1} parent=31 // pred_check
          %p195 = pneg %p84
        $region42: #{tpu_custom_call.1} parent=31 // pred_check_branch
          %197 = sbr.rel (%p195) target = $region44
        $region43: #{tpu_custom_call.1} parent=31 // pred_region
          %198 = dma.done [#allocation6], 16
        $region44: #{tpu_custom_call.1} parent=31 // pred_fallthru
          _
        %s199 = sand.u32 %s29, 1
        %s200 = scalar_lea.sflag [#allocation3], %s199
        %s201 = sand.u32 %s29, 1
        %s202 = smul.addr %s201, 512
        %s203 = scalar_lea.vmem [#allocation2], %s202
        %p204 = pneg %p42
        %p205 = pneg %p39
        %p206 = pneg %p63
        %p207 = pneg %p60
        %p208 = pneg %p84
        %p209 = pneg %p81
        %p210 = pneg %p110
        %p211 = pneg %p107
        %s212 = sand.u32 %s97, 1
        %s213 = scalar_lea.sflag [#allocation4], %s212
        %s214 = sand.u32 %s97, 1
        %s215 = smul.addr %s214, 512
        %s216 = scalar_lea.vmem [#allocation8], %s215
        %s217 = smul.u32 64, %s21
        %s218 = smul.u32 64, %s21
        %v220 = vld [vmem:[%s186] sm:$0xff]
        %v221 = vld [vmem:[%s186 + $0x8] sm:$0xff]
        %v222 = vld [vmem:[%s186 + $0x10] sm:$0xff]
        %v223 = vld [vmem:[%s186 + $0x18] sm:$0xff]
        %v224 = vld [vmem:[%s186 + $0x20] sm:$0xff]
        %v225 = vld [vmem:[%s186 + $0x28] sm:$0xff]
        %v226 = vld [vmem:[%s186 + $0x30] sm:$0xff]
        %v227 = vld [vmem:[%s186 + $0x38] sm:$0xff]
        %v228 = vld [vmem:[%s186 + $0x40] sm:$0xff]
        %v229 = vld [vmem:[%s186 + $0x48] sm:$0xff]
        %v230 = vld [vmem:[%s186 + $0x50] sm:$0xff]
        %v231 = vld [vmem:[%s186 + $0x58] sm:$0xff]
        %v232 = vld [vmem:[%s186 + $0x60] sm:$0xff]
        %v233 = vld [vmem:[%s186 + $0x68] sm:$0xff]
        %v234 = vld [vmem:[%s186 + $0x70] sm:$0xff]
        %v235 = vld [vmem:[%s186 + $0x78] sm:$0xff]
        %v236 = vld [vmem:[%s186 + $0x80] sm:$0xff]
        %v237 = vld [vmem:[%s186 + $0x88] sm:$0xff]
        %v238 = vld [vmem:[%s186 + $0x90] sm:$0xff]
        %v239 = vld [vmem:[%s186 + $0x98] sm:$0xff]
        %v240 = vld [vmem:[%s186 + $0xa0] sm:$0xff]
        %v241 = vld [vmem:[%s186 + $0xa8] sm:$0xff]
        %v242 = vld [vmem:[%s186 + $0xb0] sm:$0xff]
        %v243 = vld [vmem:[%s186 + $0xb8] sm:$0xff]
        %v244 = vld [vmem:[%s186 + $0xc0] sm:$0xff]
        %v245 = vld [vmem:[%s186 + $0xc8] sm:$0xff]
        %v246 = vld [vmem:[%s186 + $0xd0] sm:$0xff]
        %v247 = vld [vmem:[%s186 + $0xd8] sm:$0xff]
        %v248 = vld [vmem:[%s186 + $0xe0] sm:$0xff]
        %v249 = vld [vmem:[%s186 + $0xe8] sm:$0xff]
        %v250 = vld [vmem:[%s186 + $0xf0] sm:$0xff]
        %v251 = vld [vmem:[%s186 + $0xf8] sm:$0xff]
        %v252 = vld [vmem:[%s186 + $0x100] sm:$0xff]
        %v253 = vld [vmem:[%s186 + $0x108] sm:$0xff]
        %v254 = vld [vmem:[%s186 + $0x110] sm:$0xff]
        %v255 = vld [vmem:[%s186 + $0x118] sm:$0xff]
        %v256 = vld [vmem:[%s186 + $0x120] sm:$0xff]
        %v257 = vld [vmem:[%s186 + $0x128] sm:$0xff]
        %v258 = vld [vmem:[%s186 + $0x130] sm:$0xff]
        %v259 = vld [vmem:[%s186 + $0x138] sm:$0xff]
        %v260 = vld [vmem:[%s186 + $0x140] sm:$0xff]
        %v261 = vld [vmem:[%s186 + $0x148] sm:$0xff]
        %v262 = vld [vmem:[%s186 + $0x150] sm:$0xff]
        %v263 = vld [vmem:[%s186 + $0x158] sm:$0xff]
        %v264 = vld [vmem:[%s186 + $0x160] sm:$0xff]
        %v265 = vld [vmem:[%s186 + $0x168] sm:$0xff]
        %v266 = vld [vmem:[%s186 + $0x170] sm:$0xff]
        %v267 = vld [vmem:[%s186 + $0x178] sm:$0xff]
        %v268 = vld [vmem:[%s186 + $0x180] sm:$0xff]
        %v269 = vld [vmem:[%s186 + $0x188] sm:$0xff]
        %v270 = vld [vmem:[%s186 + $0x190] sm:$0xff]
        %v271 = vld [vmem:[%s186 + $0x198] sm:$0xff]
        %v272 = vld [vmem:[%s186 + $0x1a0] sm:$0xff]
        %v273 = vld [vmem:[%s186 + $0x1a8] sm:$0xff]
        %v274 = vld [vmem:[%s186 + $0x1b0] sm:$0xff]
        %v275 = vld [vmem:[%s186 + $0x1b8] sm:$0xff]
        %v276 = vld [vmem:[%s186 + $0x1c0] sm:$0xff]
        %v277 = vld [vmem:[%s186 + $0x1c8] sm:$0xff]
        %v278 = vld [vmem:[%s186 + $0x1d0] sm:$0xff]
        %v279 = vld [vmem:[%s186 + $0x1d8] sm:$0xff]
        %v280 = vld [vmem:[%s186 + $0x1e0] sm:$0xff]
        %v281 = vld [vmem:[%s186 + $0x1e8] sm:$0xff]
        %v282 = vld [vmem:[%s186 + $0x1f0] sm:$0xff]
        %v283 = vld [vmem:[%s186 + $0x1f8] sm:$0xff]
        %v284 = vld [vmem:[#allocation5] sm:$0xf]
        %v285 = vld [vmem:[#allocation5 + $0x4] sm:$0xf]
        %v286 = vld [vmem:[#allocation5 + $0x8] sm:$0xf]
        %v287 = vld [vmem:[#allocation5 + $0xc] sm:$0xf]
        %v288 = vld [vmem:[#allocation5 + $0x10] sm:$0xf]
        %v289 = vld [vmem:[#allocation5 + $0x14] sm:$0xf]
        %v290 = vld [vmem:[#allocation5 + $0x18] sm:$0xf]
        %v291 = vld [vmem:[#allocation5 + $0x1c] sm:$0xf]
        %v292 = vld [vmem:[#allocation5 + $0x20] sm:$0xf]
        %v293 = vld [vmem:[#allocation5 + $0x24] sm:$0xf]
        %v294 = vld [vmem:[#allocation5 + $0x28] sm:$0xf]
        %v295 = vld [vmem:[#allocation5 + $0x2c] sm:$0xf]
        %v296 = vld [vmem:[#allocation5 + $0x30] sm:$0xf]
        %v297 = vld [vmem:[#allocation5 + $0x34] sm:$0xf]
        %v298 = vld [vmem:[#allocation5 + $0x38] sm:$0xf]
        %v299 = vld [vmem:[#allocation5 + $0x3c] sm:$0xf]
        %v300 = vld [vmem:[#allocation5 + $0x40] sm:$0xf]
        %v301 = vld [vmem:[#allocation5 + $0x44] sm:$0xf]
        %v302 = vld [vmem:[#allocation5 + $0x48] sm:$0xf]
        %v303 = vld [vmem:[#allocation5 + $0x4c] sm:$0xf]
        %v304 = vld [vmem:[#allocation5 + $0x50] sm:$0xf]
        %v305 = vld [vmem:[#allocation5 + $0x54] sm:$0xf]
        %v306 = vld [vmem:[#allocation5 + $0x58] sm:$0xf]
        %v307 = vld [vmem:[#allocation5 + $0x5c] sm:$0xf]
        %v308 = vld [vmem:[#allocation5 + $0x60] sm:$0xf]
        %v309 = vld [vmem:[#allocation5 + $0x64] sm:$0xf]
        %v310 = vld [vmem:[#allocation5 + $0x68] sm:$0xf]
        %v311 = vld [vmem:[#allocation5 + $0x6c] sm:$0xf]
        %v312 = vld [vmem:[#allocation5 + $0x70] sm:$0xf]
        %v313 = vld [vmem:[#allocation5 + $0x74] sm:$0xf]
        %v314 = vld [vmem:[#allocation5 + $0x78] sm:$0xf]
        %v315 = vld [vmem:[#allocation5 + $0x7c] sm:$0xf]
        %v316 = vld [vmem:[#allocation7] sm:$0x1]
        %v318 = vlaneseq
        %v319 = vshrl.u32 %v318, 7
        %v320 = vsub.s32 0, %v319
        %v321 = vrot.slane %v316, %v320
        %v387 = vunpack.c.l.b16 %v220
        %v388 = vunpack.c.h.b16 %v220
        %v389 = vunpack.c.l.b16 %v221
        %v390 = vunpack.c.h.b16 %v221
        %v391 = vunpack.c.l.b16 %v222
        %v392 = vunpack.c.h.b16 %v222
        %v393 = vunpack.c.l.b16 %v223
        %v394 = vunpack.c.h.b16 %v223
        %v395 = vunpack.c.l.b16 %v224
        %v396 = vunpack.c.h.b16 %v224
        %v397 = vunpack.c.l.b16 %v225
        %v398 = vunpack.c.h.b16 %v225
        %v399 = vunpack.c.l.b16 %v226
        %v400 = vunpack.c.h.b16 %v226
        %v401 = vunpack.c.l.b16 %v227
        %v402 = vunpack.c.h.b16 %v227
        %v403 = vunpack.c.l.b16 %v228
        %v404 = vunpack.c.h.b16 %v228
        %v405 = vunpack.c.l.b16 %v229
        %v406 = vunpack.c.h.b16 %v229
        %v407 = vunpack.c.l.b16 %v230
        %v408 = vunpack.c.h.b16 %v230
        %v409 = vunpack.c.l.b16 %v231
        %v410 = vunpack.c.h.b16 %v231
        %v411 = vunpack.c.l.b16 %v232
        %v412 = vunpack.c.h.b16 %v232
        %v413 = vunpack.c.l.b16 %v233
        %v414 = vunpack.c.h.b16 %v233
        %v415 = vunpack.c.l.b16 %v234
        %v416 = vunpack.c.h.b16 %v234
        %v417 = vunpack.c.l.b16 %v235
        %v418 = vunpack.c.h.b16 %v235
        %v419 = vunpack.c.l.b16 %v236
        %v420 = vunpack.c.h.b16 %v236
        %v421 = vunpack.c.l.b16 %v237
        %v422 = vunpack.c.h.b16 %v237
        %v423 = vunpack.c.l.b16 %v238
        %v424 = vunpack.c.h.b16 %v238
        %v425 = vunpack.c.l.b16 %v239
        %v426 = vunpack.c.h.b16 %v239
        %v427 = vunpack.c.l.b16 %v240
        %v428 = vunpack.c.h.b16 %v240
        %v429 = vunpack.c.l.b16 %v241
        %v430 = vunpack.c.h.b16 %v241
        %v431 = vunpack.c.l.b16 %v242
        %v432 = vunpack.c.h.b16 %v242
        %v433 = vunpack.c.l.b16 %v243
        %v434 = vunpack.c.h.b16 %v243
        %v435 = vunpack.c.l.b16 %v244
        %v436 = vunpack.c.h.b16 %v244
        %v437 = vunpack.c.l.b16 %v245
        %v438 = vunpack.c.h.b16 %v245
        %v439 = vunpack.c.l.b16 %v246
        %v440 = vunpack.c.h.b16 %v246
        %v441 = vunpack.c.l.b16 %v247
        %v442 = vunpack.c.h.b16 %v247
        %v443 = vunpack.c.l.b16 %v248
        %v444 = vunpack.c.h.b16 %v248
        %v445 = vunpack.c.l.b16 %v249
        %v446 = vunpack.c.h.b16 %v249
        %v447 = vunpack.c.l.b16 %v250
        %v448 = vunpack.c.h.b16 %v250
        %v449 = vunpack.c.l.b16 %v251
        %v450 = vunpack.c.h.b16 %v251
        %v451 = vunpack.c.l.b16 %v252
        %v452 = vunpack.c.h.b16 %v252
        %v453 = vunpack.c.l.b16 %v253
        %v454 = vunpack.c.h.b16 %v253
        %v455 = vunpack.c.l.b16 %v254
        %v456 = vunpack.c.h.b16 %v254
        %v457 = vunpack.c.l.b16 %v255
        %v458 = vunpack.c.h.b16 %v255
        %v459 = vunpack.c.l.b16 %v256
        %v460 = vunpack.c.h.b16 %v256
        %v461 = vunpack.c.l.b16 %v257
        %v462 = vunpack.c.h.b16 %v257
        %v463 = vunpack.c.l.b16 %v258
        %v464 = vunpack.c.h.b16 %v258
        %v465 = vunpack.c.l.b16 %v259
        %v466 = vunpack.c.h.b16 %v259
        %v467 = vunpack.c.l.b16 %v260
        %v468 = vunpack.c.h.b16 %v260
        %v469 = vunpack.c.l.b16 %v261
        %v470 = vunpack.c.h.b16 %v261
        %v471 = vunpack.c.l.b16 %v262
        %v472 = vunpack.c.h.b16 %v262
        %v473 = vunpack.c.l.b16 %v263
        %v474 = vunpack.c.h.b16 %v263
        %v475 = vunpack.c.l.b16 %v264
        %v476 = vunpack.c.h.b16 %v264
        %v477 = vunpack.c.l.b16 %v265
        %v478 = vunpack.c.h.b16 %v265
        %v479 = vunpack.c.l.b16 %v266
        %v480 = vunpack.c.h.b16 %v266
        %v481 = vunpack.c.l.b16 %v267
        %v482 = vunpack.c.h.b16 %v267
        %v483 = vunpack.c.l.b16 %v268
        %v484 = vunpack.c.h.b16 %v268
        %v485 = vunpack.c.l.b16 %v269
        %v486 = vunpack.c.h.b16 %v269
        %v487 = vunpack.c.l.b16 %v270
        %v488 = vunpack.c.h.b16 %v270
        %v489 = vunpack.c.l.b16 %v271
        %v490 = vunpack.c.h.b16 %v271
        %v491 = vunpack.c.l.b16 %v272
        %v492 = vunpack.c.h.b16 %v272
        %v493 = vunpack.c.l.b16 %v273
        %v494 = vunpack.c.h.b16 %v273
        %v495 = vunpack.c.l.b16 %v274
        %v496 = vunpack.c.h.b16 %v274
        %v497 = vunpack.c.l.b16 %v275
        %v498 = vunpack.c.h.b16 %v275
        %v499 = vunpack.c.l.b16 %v276
        %v500 = vunpack.c.h.b16 %v276
        %v501 = vunpack.c.l.b16 %v277
        %v502 = vunpack.c.h.b16 %v277
        %v503 = vunpack.c.l.b16 %v278
        %v504 = vunpack.c.h.b16 %v278
        %v505 = vunpack.c.l.b16 %v279
        %v506 = vunpack.c.h.b16 %v279
        %v507 = vunpack.c.l.b16 %v280
        %v508 = vunpack.c.h.b16 %v280
        %v509 = vunpack.c.l.b16 %v281
        %v510 = vunpack.c.h.b16 %v281
        %v511 = vunpack.c.l.b16 %v282
        %v512 = vunpack.c.h.b16 %v282
        %v513 = vunpack.c.l.b16 %v283
        %v514 = vunpack.c.h.b16 %v283
        %v515 = vpack.c.b16 %v389, %v387
        %v516 = vpack.c.b16 %v390, %v388
        %v517 = vpack.c.b16 %v393, %v391
        %v518 = vpack.c.b16 %v394, %v392
        %v519 = vpack.c.b16 %v397, %v395
        %v520 = vpack.c.b16 %v398, %v396
        %v521 = vpack.c.b16 %v401, %v399
        %v522 = vpack.c.b16 %v402, %v400
        %v523 = vpack.c.b16 %v405, %v403
        %v524 = vpack.c.b16 %v406, %v404
        %v525 = vpack.c.b16 %v409, %v407
        %v526 = vpack.c.b16 %v410, %v408
        %v527 = vpack.c.b16 %v413, %v411
        %v528 = vpack.c.b16 %v414, %v412
        %v529 = vpack.c.b16 %v417, %v415
        %v530 = vpack.c.b16 %v418, %v416
        %v531 = vpack.c.b16 %v421, %v419
        %v532 = vpack.c.b16 %v422, %v420
        %v533 = vpack.c.b16 %v425, %v423
        %v534 = vpack.c.b16 %v426, %v424
        %v535 = vpack.c.b16 %v429, %v427
        %v536 = vpack.c.b16 %v430, %v428
        %v537 = vpack.c.b16 %v433, %v431
        %v538 = vpack.c.b16 %v434, %v432
        %v539 = vpack.c.b16 %v437, %v435
        %v540 = vpack.c.b16 %v438, %v436
        %v541 = vpack.c.b16 %v441, %v439
        %v542 = vpack.c.b16 %v442, %v440
        %v543 = vpack.c.b16 %v445, %v443
        %v544 = vpack.c.b16 %v446, %v444
        %v545 = vpack.c.b16 %v449, %v447
        %v546 = vpack.c.b16 %v450, %v448
        %v547 = vpack.c.b16 %v453, %v451
        %v548 = vpack.c.b16 %v454, %v452
        %v549 = vpack.c.b16 %v457, %v455
        %v550 = vpack.c.b16 %v458, %v456
        %v551 = vpack.c.b16 %v461, %v459
        %v552 = vpack.c.b16 %v462, %v460
        %v553 = vpack.c.b16 %v465, %v463
        %v554 = vpack.c.b16 %v466, %v464
        %v555 = vpack.c.b16 %v469, %v467
        %v556 = vpack.c.b16 %v470, %v468
        %v557 = vpack.c.b16 %v473, %v471
        %v558 = vpack.c.b16 %v474, %v472
        %v559 = vpack.c.b16 %v477, %v475
        %v560 = vpack.c.b16 %v478, %v476
        %v561 = vpack.c.b16 %v481, %v479
        %v562 = vpack.c.b16 %v482, %v480
        %v563 = vpack.c.b16 %v485, %v483
        %v564 = vpack.c.b16 %v486, %v484
        %v565 = vpack.c.b16 %v489, %v487
        %v566 = vpack.c.b16 %v490, %v488
        %v567 = vpack.c.b16 %v493, %v491
        %v568 = vpack.c.b16 %v494, %v492
        %v569 = vpack.c.b16 %v497, %v495
        %v570 = vpack.c.b16 %v498, %v496
        %v571 = vpack.c.b16 %v501, %v499
        %v572 = vpack.c.b16 %v502, %v500
        %v573 = vpack.c.b16 %v505, %v503
        %v574 = vpack.c.b16 %v506, %v504
        %v575 = vpack.c.b16 %v509, %v507
        %v576 = vpack.c.b16 %v510, %v508
        %v577 = vpack.c.b16 %v513, %v511
        %v578 = vpack.c.b16 %v514, %v512
        %v675 = vunpack.c.l.b16 %v284
        %v676 = vunpack.c.l.b16 %v285
        %v677 = vunpack.c.l.b16 %v286
        %v678 = vunpack.c.l.b16 %v287
        %v679 = vunpack.c.l.b16 %v288
        %v680 = vunpack.c.l.b16 %v289
        %v681 = vunpack.c.l.b16 %v290
        %v682 = vunpack.c.l.b16 %v291
        %v683 = vunpack.c.l.b16 %v292
        %v684 = vunpack.c.l.b16 %v293
        %v685 = vunpack.c.l.b16 %v294
        %v686 = vunpack.c.l.b16 %v295
        %v687 = vunpack.c.l.b16 %v296
        %v688 = vunpack.c.l.b16 %v297
        %v689 = vunpack.c.l.b16 %v298
        %v690 = vunpack.c.l.b16 %v299
        %v691 = vunpack.c.l.b16 %v300
        %v692 = vunpack.c.l.b16 %v301
        %v693 = vunpack.c.l.b16 %v302
        %v694 = vunpack.c.l.b16 %v303
        %v695 = vunpack.c.l.b16 %v304
        %v696 = vunpack.c.l.b16 %v305
        %v697 = vunpack.c.l.b16 %v306
        %v698 = vunpack.c.l.b16 %v307
        %v699 = vunpack.c.l.b16 %v308
        %v700 = vunpack.c.l.b16 %v309
        %v701 = vunpack.c.l.b16 %v310
        %v702 = vunpack.c.l.b16 %v311
        %v703 = vunpack.c.l.b16 %v312
        %v704 = vunpack.c.l.b16 %v313
        %v705 = vunpack.c.l.b16 %v314
        %v706 = vunpack.c.l.b16 %v315
        %v707 = vpack.c.b16 %v676, %v675
        %v708 = vpack.c.b16 %v678, %v677
        %v709 = vpack.c.b16 %v680, %v679
        %v710 = vpack.c.b16 %v682, %v681
        %v711 = vpack.c.b16 %v684, %v683
        %v712 = vpack.c.b16 %v686, %v685
        %v713 = vpack.c.b16 %v688, %v687
        %v714 = vpack.c.b16 %v690, %v689
        %v715 = vpack.c.b16 %v692, %v691
        %v716 = vpack.c.b16 %v694, %v693
        %v717 = vpack.c.b16 %v696, %v695
        %v718 = vpack.c.b16 %v698, %v697
        %v719 = vpack.c.b16 %v700, %v699
        %v720 = vpack.c.b16 %v702, %v701
        %v721 = vpack.c.b16 %v704, %v703
        %v722 = vpack.c.b16 %v706, %v705
        %739 = vmatprep.subr.bf16.mxu0 0
        %740 = vmatpush1.bf16.msra.mxu0 %v714
        %741 = vmatprep.subr.bf16.mxu0 0
        %742 = vmatpush1.bf16.msra.mxu0 %v713
        %743 = vmatprep.subr.bf16.mxu0 0
        %744 = vmatpush1.bf16.msra.mxu0 %v712
        %745 = vmatprep.subr.bf16.mxu0 0
        %746 = vmatpush1.bf16.msra.mxu0 %v711
        %747 = vmatprep.subr.bf16.mxu0 0
        %748 = vmatpush1.bf16.msra.mxu0 %v710
        %749 = vmatprep.subr.bf16.mxu0 0
        %750 = vmatpush1.bf16.msra.mxu0 %v709
        %751 = vmatprep.subr.bf16.mxu0 0
        %752 = vmatpush1.bf16.msra.mxu0 %v708
        %753 = vmatprep.subr.bf16.mxu0 0
        %754 = vmatpush1.bf16.msra.mxu0 %v707
        %755 = vmatprep.subr.bf16.mxu0 0
        %756 = vmatpush2.bf16.msra.mxu0 %v722
        %757 = vmatprep.subr.bf16.mxu0 0
        %758 = vmatpush2.bf16.msra.mxu0 %v721
        %759 = vmatprep.subr.bf16.mxu0 0
        %760 = vmatpush2.bf16.msra.mxu0 %v720
        %761 = vmatprep.subr.bf16.mxu0 0
        %762 = vmatpush2.bf16.msra.mxu0 %v719
        %763 = vmatprep.subr.bf16.mxu0 0
        %764 = vmatpush2.bf16.msra.mxu0 %v718
        %765 = vmatprep.subr.bf16.mxu0 0
        %766 = vmatpush2.bf16.msra.mxu0 %v717
        %767 = vmatprep.subr.bf16.mxu0 0
        %768 = vmatpush2.bf16.msra.mxu0 %v716
        %769 = vmatprep.subr.bf16.mxu0 0
        %770 = vmatpush2.bf16.msra.mxu0 %v715
        %771 = vmatprep.mubr.bf16.mxu0 %v516
        %772 = vmatmul.mubr.bf16.gmra.mxu0 %v515
        %v773 = vpop.f32.mrf.mxu0
        %v774 = vadd.f32 %v321, %v773
        %v775 = vpop.f32.mrf.mxu0
        %v776 = vpop.f32.mrf.mxu0
        %v777 = vadd.f32 %v321, %v776
        %v778 = vpop.f32.mrf.mxu0
        %779 = vmatprep.mubr.bf16.mxu0 %v518
        %780 = vmatmul.mubr.bf16.gmra.mxu0 %v517
        %v781 = vpop.f32.mrf.mxu0
        %v782 = vadd.f32 %v321, %v781
        %v783 = vpop.f32.mrf.mxu0
        %v784 = vpop.f32.mrf.mxu0
        %v785 = vadd.f32 %v321, %v784
        %v786 = vpop.f32.mrf.mxu0
        %787 = vmatprep.mubr.bf16.mxu0 %v520
        %788 = vmatmul.mubr.bf16.gmra.mxu0 %v519
        %v789 = vpop.f32.mrf.mxu0
        %v790 = vadd.f32 %v321, %v789
        %v791 = vpop.f32.mrf.mxu0
        %v792 = vpop.f32.mrf.mxu0
        %v793 = vadd.f32 %v321, %v792
        %v794 = vpop.f32.mrf.mxu0
        %795 = vmatprep.mubr.bf16.mxu0 %v522
        %796 = vmatmul.mubr.bf16.gmra.mxu0 %v521
        %v797 = vpop.f32.mrf.mxu0
        %v798 = vadd.f32 %v321, %v797
        %v799 = vpop.f32.mrf.mxu0
        %v800 = vpop.f32.mrf.mxu0
        %v801 = vadd.f32 %v321, %v800
        %v802 = vpop.f32.mrf.mxu0
        %803 = vmatprep.mubr.bf16.mxu0 %v524
        %804 = vmatmul.mubr.bf16.gmra.mxu0 %v523
        %v805 = vpop.f32.mrf.mxu0
        %v806 = vadd.f32 %v321, %v805
        %v807 = vpop.f32.mrf.mxu0
        %v808 = vpop.f32.mrf.mxu0
        %v809 = vadd.f32 %v321, %v808
        %v810 = vpop.f32.mrf.mxu0
        %811 = vmatprep.mubr.bf16.mxu0 %v526
        %812 = vmatmul.mubr.bf16.gmra.mxu0 %v525
        %v813 = vpop.f32.mrf.mxu0
        %v814 = vadd.f32 %v321, %v813
        %v815 = vpop.f32.mrf.mxu0
        %v816 = vpop.f32.mrf.mxu0
        %v817 = vadd.f32 %v321, %v816
        %v818 = vpop.f32.mrf.mxu0
        %819 = vmatprep.mubr.bf16.mxu0 %v528
        %820 = vmatmul.mubr.bf16.gmra.mxu0 %v527
        %v821 = vpop.f32.mrf.mxu0
        %v822 = vadd.f32 %v321, %v821
        %v823 = vpop.f32.mrf.mxu0
        %v824 = vpop.f32.mrf.mxu0
        %v825 = vadd.f32 %v321, %v824
        %v826 = vpop.f32.mrf.mxu0
        %827 = vmatprep.mubr.bf16.mxu0 %v530
        %828 = vmatmul.mubr.bf16.gmra.mxu0 %v529
        %v829 = vpop.f32.mrf.mxu0
        %v830 = vadd.f32 %v321, %v829
        %v831 = vpop.f32.mrf.mxu0
        %v832 = vpop.f32.mrf.mxu0
        %v833 = vadd.f32 %v321, %v832
        %v834 = vpop.f32.mrf.mxu0
        %835 = vmatprep.mubr.bf16.mxu0 %v532
        %836 = vmatmul.mubr.bf16.gmra.mxu0 %v531
        %v837 = vpop.f32.mrf.mxu0
        %v838 = vadd.f32 %v321, %v837
        %v839 = vpop.f32.mrf.mxu0
        %v840 = vpop.f32.mrf.mxu0
        %v841 = vadd.f32 %v321, %v840
        %v842 = vpop.f32.mrf.mxu0
        %843 = vmatprep.mubr.bf16.mxu0 %v534
        %844 = vmatmul.mubr.bf16.gmra.mxu0 %v533
        %v845 = vpop.f32.mrf.mxu0
        %v846 = vadd.f32 %v321, %v845
        %v847 = vpop.f32.mrf.mxu0
        %v848 = vpop.f32.mrf.mxu0
        %v849 = vadd.f32 %v321, %v848
        %v850 = vpop.f32.mrf.mxu0
        %851 = vmatprep.mubr.bf16.mxu0 %v536
        %852 = vmatmul.mubr.bf16.gmra.mxu0 %v535
        %v853 = vpop.f32.mrf.mxu0
        %v854 = vadd.f32 %v321, %v853
        %v855 = vpop.f32.mrf.mxu0
        %v856 = vpop.f32.mrf.mxu0
        %v857 = vadd.f32 %v321, %v856
        %v858 = vpop.f32.mrf.mxu0
        %859 = vmatprep.mubr.bf16.mxu0 %v538
        %860 = vmatmul.mubr.bf16.gmra.mxu0 %v537
        %v861 = vpop.f32.mrf.mxu0
        %v862 = vadd.f32 %v321, %v861
        %v863 = vpop.f32.mrf.mxu0
        %v864 = vpop.f32.mrf.mxu0
        %v865 = vadd.f32 %v321, %v864
        %v866 = vpop.f32.mrf.mxu0
        %867 = vmatprep.mubr.bf16.mxu0 %v540
        %868 = vmatmul.mubr.bf16.gmra.mxu0 %v539
        %v869 = vpop.f32.mrf.mxu0
        %v870 = vadd.f32 %v321, %v869
        %v871 = vpop.f32.mrf.mxu0
        %v872 = vpop.f32.mrf.mxu0
        %v873 = vadd.f32 %v321, %v872
        %v874 = vpop.f32.mrf.mxu0
        %875 = vmatprep.mubr.bf16.mxu0 %v542
        %876 = vmatmul.mubr.bf16.gmra.mxu0 %v541
        %v877 = vpop.f32.mrf.mxu0
        %v878 = vadd.f32 %v321, %v877
        %v879 = vpop.f32.mrf.mxu0
        %v880 = vpop.f32.mrf.mxu0
        %v881 = vadd.f32 %v321, %v880
        %v882 = vpop.f32.mrf.mxu0
        %883 = vmatprep.mubr.bf16.mxu0 %v544
        %884 = vmatmul.mubr.bf16.gmra.mxu0 %v543
        %v885 = vpop.f32.mrf.mxu0
        %v886 = vadd.f32 %v321, %v885
        %v887 = vpop.f32.mrf.mxu0
        %v888 = vpop.f32.mrf.mxu0
        %v889 = vadd.f32 %v321, %v888
        %v890 = vpop.f32.mrf.mxu0
        %891 = vmatprep.mubr.bf16.mxu0 %v546
        %892 = vmatmul.mubr.bf16.gmra.mxu0 %v545
        %v893 = vpop.f32.mrf.mxu0
        %v894 = vadd.f32 %v321, %v893
        %v895 = vpop.f32.mrf.mxu0
        %v896 = vpop.f32.mrf.mxu0
        %v897 = vadd.f32 %v321, %v896
        %v898 = vpop.f32.mrf.mxu0
        %899 = vmatprep.mubr.bf16.mxu0 %v548
        %900 = vmatmul.mubr.bf16.gmra.mxu0 %v547
        %v901 = vpop.f32.mrf.mxu0
        %v902 = vadd.f32 %v321, %v901
        %v903 = vpop.f32.mrf.mxu0
        %v904 = vpop.f32.mrf.mxu0
        %v905 = vadd.f32 %v321, %v904
        %v906 = vpop.f32.mrf.mxu0
        %907 = vmatprep.mubr.bf16.mxu0 %v550
        %908 = vmatmul.mubr.bf16.gmra.mxu0 %v549
        %v909 = vpop.f32.mrf.mxu0
        %v910 = vadd.f32 %v321, %v909
        %v911 = vpop.f32.mrf.mxu0
        %v912 = vpop.f32.mrf.mxu0
        %v913 = vadd.f32 %v321, %v912
        %v914 = vpop.f32.mrf.mxu0
        %915 = vmatprep.mubr.bf16.mxu0 %v552
        %916 = vmatmul.mubr.bf16.gmra.mxu0 %v551
        %v917 = vpop.f32.mrf.mxu0
        %v918 = vadd.f32 %v321, %v917
        %v919 = vpop.f32.mrf.mxu0
        %v920 = vpop.f32.mrf.mxu0
        %v921 = vadd.f32 %v321, %v920
        %v922 = vpop.f32.mrf.mxu0
        %923 = vmatprep.mubr.bf16.mxu0 %v554
        %924 = vmatmul.mubr.bf16.gmra.mxu0 %v553
        %v925 = vpop.f32.mrf.mxu0
        %v926 = vadd.f32 %v321, %v925
        %v927 = vpop.f32.mrf.mxu0
        %v928 = vpop.f32.mrf.mxu0
        %v929 = vadd.f32 %v321, %v928
        %v930 = vpop.f32.mrf.mxu0
        %931 = vmatprep.mubr.bf16.mxu0 %v556
        %932 = vmatmul.mubr.bf16.gmra.mxu0 %v555
        %v933 = vpop.f32.mrf.mxu0
        %v934 = vadd.f32 %v321, %v933
        %v935 = vpop.f32.mrf.mxu0
        %v936 = vpop.f32.mrf.mxu0
        %v937 = vadd.f32 %v321, %v936
        %v938 = vpop.f32.mrf.mxu0
        %939 = vmatprep.mubr.bf16.mxu0 %v558
        %940 = vmatmul.mubr.bf16.gmra.mxu0 %v557
        %v941 = vpop.f32.mrf.mxu0
        %v942 = vadd.f32 %v321, %v941
        %v943 = vpop.f32.mrf.mxu0
        %v944 = vpop.f32.mrf.mxu0
        %v945 = vadd.f32 %v321, %v944
        %v946 = vpop.f32.mrf.mxu0
        %947 = vmatprep.mubr.bf16.mxu0 %v560
        %948 = vmatmul.mubr.bf16.gmra.mxu0 %v559
        %v949 = vpop.f32.mrf.mxu0
        %v950 = vadd.f32 %v321, %v949
        %v951 = vpop.f32.mrf.mxu0
        %v952 = vpop.f32.mrf.mxu0
        %v953 = vadd.f32 %v321, %v952
        %v954 = vpop.f32.mrf.mxu0
        %955 = vmatprep.mubr.bf16.mxu0 %v562
        %956 = vmatmul.mubr.bf16.gmra.mxu0 %v561
        %v957 = vpop.f32.mrf.mxu0
        %v958 = vadd.f32 %v321, %v957
        %v959 = vpop.f32.mrf.mxu0
        %v960 = vpop.f32.mrf.mxu0
        %v961 = vadd.f32 %v321, %v960
        %v962 = vpop.f32.mrf.mxu0
        %963 = vmatprep.mubr.bf16.mxu0 %v564
        %964 = vmatmul.mubr.bf16.gmra.mxu0 %v563
        %v965 = vpop.f32.mrf.mxu0
        %v966 = vadd.f32 %v321, %v965
        %v967 = vpop.f32.mrf.mxu0
        %v968 = vpop.f32.mrf.mxu0
        %v969 = vadd.f32 %v321, %v968
        %v970 = vpop.f32.mrf.mxu0
        %971 = vmatprep.mubr.bf16.mxu0 %v566
        %972 = vmatmul.mubr.bf16.gmra.mxu0 %v565
        %v973 = vpop.f32.mrf.mxu0
        %v974 = vadd.f32 %v321, %v973
        %v975 = vpop.f32.mrf.mxu0
        %v976 = vpop.f32.mrf.mxu0
        %v977 = vadd.f32 %v321, %v976
        %v978 = vpop.f32.mrf.mxu0
        %979 = vmatprep.mubr.bf16.mxu0 %v568
        %980 = vmatmul.mubr.bf16.gmra.mxu0 %v567
        %v981 = vpop.f32.mrf.mxu0
        %v982 = vadd.f32 %v321, %v981
        %v983 = vpop.f32.mrf.mxu0
        %v984 = vpop.f32.mrf.mxu0
        %v985 = vadd.f32 %v321, %v984
        %v986 = vpop.f32.mrf.mxu0
        %987 = vmatprep.mubr.bf16.mxu0 %v570
        %988 = vmatmul.mubr.bf16.gmra.mxu0 %v569
        %v989 = vpop.f32.mrf.mxu0
        %v990 = vadd.f32 %v321, %v989
        %v991 = vpop.f32.mrf.mxu0
        %v992 = vpop.f32.mrf.mxu0
        %v993 = vadd.f32 %v321, %v992
        %v994 = vpop.f32.mrf.mxu0
        %995 = vmatprep.mubr.bf16.mxu0 %v572
        %996 = vmatmul.mubr.bf16.gmra.mxu0 %v571
        %v997 = vpop.f32.mrf.mxu0
        %v998 = vadd.f32 %v321, %v997
        %v999 = vpop.f32.mrf.mxu0
        %v1000 = vpop.f32.mrf.mxu0
        %v1001 = vadd.f32 %v321, %v1000
        %v1002 = vpop.f32.mrf.mxu0
        %1003 = vmatprep.mubr.bf16.mxu0 %v574
        %1004 = vmatmul.mubr.bf16.gmra.mxu0 %v573
        %v1005 = vpop.f32.mrf.mxu0
        %v1006 = vadd.f32 %v321, %v1005
        %v1007 = vpop.f32.mrf.mxu0
        %v1008 = vpop.f32.mrf.mxu0
        %v1009 = vadd.f32 %v321, %v1008
        %v1010 = vpop.f32.mrf.mxu0
        %1011 = vmatprep.mubr.bf16.mxu0 %v576
        %1012 = vmatmul.mubr.bf16.gmra.mxu0 %v575
        %v1013 = vpop.f32.mrf.mxu0
        %v1014 = vadd.f32 %v321, %v1013
        %v1015 = vpop.f32.mrf.mxu0
        %v1016 = vpop.f32.mrf.mxu0
        %v1017 = vadd.f32 %v321, %v1016
        %v1018 = vpop.f32.mrf.mxu0
        %1019 = vmatprep.mubr.bf16.mxu0 %v578
        %1020 = vmatmul.mubr.bf16.gmra.mxu0 %v577
        %v1021 = vpop.f32.mrf.mxu0
        %v1022 = vadd.f32 %v321, %v1021
        %v1023 = vpop.f32.mrf.mxu0
        %v1024 = vpop.f32.mrf.mxu0
        %v1025 = vadd.f32 %v321, %v1024
        %v1026 = vpop.f32.mrf.mxu0
        %1027 = vdwg.mxu0
        %v1028 = vmax.f32 %v774, 0.0
        %v1029 = vmax.f32 %v777, 0.0
        %v1030 = vmax.f32 %v782, 0.0
        %v1031 = vmax.f32 %v785, 0.0
        %v1032 = vmax.f32 %v790, 0.0
        %v1033 = vmax.f32 %v793, 0.0
        %v1034 = vmax.f32 %v798, 0.0
        %v1035 = vmax.f32 %v801, 0.0
        %v1036 = vmax.f32 %v806, 0.0
        %v1037 = vmax.f32 %v809, 0.0
        %v1038 = vmax.f32 %v814, 0.0
        %v1039 = vmax.f32 %v817, 0.0
        %v1040 = vmax.f32 %v822, 0.0
        %v1041 = vmax.f32 %v825, 0.0
        %v1042 = vmax.f32 %v830, 0.0
        %v1043 = vmax.f32 %v833, 0.0
        %v1044 = vmax.f32 %v838, 0.0
        %v1045 = vmax.f32 %v841, 0.0
        %v1046 = vmax.f32 %v846, 0.0
        %v1047 = vmax.f32 %v849, 0.0
        %v1048 = vmax.f32 %v854, 0.0
        %v1049 = vmax.f32 %v857, 0.0
        %v1050 = vmax.f32 %v862, 0.0
        %v1051 = vmax.f32 %v865, 0.0
        %v1052 = vmax.f32 %v870, 0.0
        %v1053 = vmax.f32 %v873, 0.0
        %v1054 = vmax.f32 %v878, 0.0
        %v1055 = vmax.f32 %v881, 0.0
        %v1056 = vmax.f32 %v886, 0.0
        %v1057 = vmax.f32 %v889, 0.0
        %v1058 = vmax.f32 %v894, 0.0
        %v1059 = vmax.f32 %v897, 0.0
        %v1060 = vmax.f32 %v902, 0.0
        %v1061 = vmax.f32 %v905, 0.0
        %v1062 = vmax.f32 %v910, 0.0
        %v1063 = vmax.f32 %v913, 0.0
        %v1064 = vmax.f32 %v918, 0.0
        %v1065 = vmax.f32 %v921, 0.0
        %v1066 = vmax.f32 %v926, 0.0
        %v1067 = vmax.f32 %v929, 0.0
        %v1068 = vmax.f32 %v934, 0.0
        %v1069 = vmax.f32 %v937, 0.0
        %v1070 = vmax.f32 %v942, 0.0
        %v1071 = vmax.f32 %v945, 0.0
        %v1072 = vmax.f32 %v950, 0.0
        %v1073 = vmax.f32 %v953, 0.0
        %v1074 = vmax.f32 %v958, 0.0
        %v1075 = vmax.f32 %v961, 0.0
        %v1076 = vmax.f32 %v966, 0.0
        %v1077 = vmax.f32 %v969, 0.0
        %v1078 = vmax.f32 %v974, 0.0
        %v1079 = vmax.f32 %v977, 0.0
        %v1080 = vmax.f32 %v982, 0.0
        %v1081 = vmax.f32 %v985, 0.0
        %v1082 = vmax.f32 %v990, 0.0
        %v1083 = vmax.f32 %v993, 0.0
        %v1084 = vmax.f32 %v998, 0.0
        %v1085 = vmax.f32 %v1001, 0.0
        %v1086 = vmax.f32 %v1006, 0.0
        %v1087 = vmax.f32 %v1009, 0.0
        %v1088 = vmax.f32 %v1014, 0.0
        %v1089 = vmax.f32 %v1017, 0.0
        %v1090 = vmax.f32 %v1022, 0.0
        %v1091 = vmax.f32 %v1025, 0.0
        %1092 = vst [vmem:[%s216] sm:$0xff] %v1028
        %1093 = vst [vmem:[%s216 + $0x8] sm:$0xff] %v1029
        %1094 = vst [vmem:[%s216 + $0x10] sm:$0xff] %v1030
        %1095 = vst [vmem:[%s216 + $0x18] sm:$0xff] %v1031
        %1096 = vst [vmem:[%s216 + $0x20] sm:$0xff] %v1032
        %1097 = vst [vmem:[%s216 + $0x28] sm:$0xff] %v1033
        %1098 = vst [vmem:[%s216 + $0x30] sm:$0xff] %v1034
        %1099 = vst [vmem:[%s216 + $0x38] sm:$0xff] %v1035
        %1100 = vst [vmem:[%s216 + $0x40] sm:$0xff] %v1036
        %1101 = vst [vmem:[%s216 + $0x48] sm:$0xff] %v1037
        %1102 = vst [vmem:[%s216 + $0x50] sm:$0xff] %v1038
        %1103 = vst [vmem:[%s216 + $0x58] sm:$0xff] %v1039
        %1104 = vst [vmem:[%s216 + $0x60] sm:$0xff] %v1040
        %1105 = vst [vmem:[%s216 + $0x68] sm:$0xff] %v1041
        %1106 = vst [vmem:[%s216 + $0x70] sm:$0xff] %v1042
        %1107 = vst [vmem:[%s216 + $0x78] sm:$0xff] %v1043
        %1108 = vst [vmem:[%s216 + $0x80] sm:$0xff] %v1044
        %1109 = vst [vmem:[%s216 + $0x88] sm:$0xff] %v1045
        %1110 = vst [vmem:[%s216 + $0x90] sm:$0xff] %v1046
        %1111 = vst [vmem:[%s216 + $0x98] sm:$0xff] %v1047
        %1112 = vst [vmem:[%s216 + $0xa0] sm:$0xff] %v1048
        %1113 = vst [vmem:[%s216 + $0xa8] sm:$0xff] %v1049
        %1114 = vst [vmem:[%s216 + $0xb0] sm:$0xff] %v1050
        %1115 = vst [vmem:[%s216 + $0xb8] sm:$0xff] %v1051
        %1116 = vst [vmem:[%s216 + $0xc0] sm:$0xff] %v1052
        %1117 = vst [vmem:[%s216 + $0xc8] sm:$0xff] %v1053
        %1118 = vst [vmem:[%s216 + $0xd0] sm:$0xff] %v1054
        %1119 = vst [vmem:[%s216 + $0xd8] sm:$0xff] %v1055
        %1120 = vst [vmem:[%s216 + $0xe0] sm:$0xff] %v1056
        %1121 = vst [vmem:[%s216 + $0xe8] sm:$0xff] %v1057
        %1122 = vst [vmem:[%s216 + $0xf0] sm:$0xff] %v1058
        %1123 = vst [vmem:[%s216 + $0xf8] sm:$0xff] %v1059
        %1124 = vst [vmem:[%s216 + $0x100] sm:$0xff] %v1060
        %1125 = vst [vmem:[%s216 + $0x108] sm:$0xff] %v1061
        %1126 = vst [vmem:[%s216 + $0x110] sm:$0xff] %v1062
        %1127 = vst [vmem:[%s216 + $0x118] sm:$0xff] %v1063
        %1128 = vst [vmem:[%s216 + $0x120] sm:$0xff] %v1064
        %1129 = vst [vmem:[%s216 + $0x128] sm:$0xff] %v1065
        %1130 = vst [vmem:[%s216 + $0x130] sm:$0xff] %v1066
        %1131 = vst [vmem:[%s216 + $0x138] sm:$0xff] %v1067
        %1132 = vst [vmem:[%s216 + $0x140] sm:$0xff] %v1068
        %1133 = vst [vmem:[%s216 + $0x148] sm:$0xff] %v1069
        %1134 = vst [vmem:[%s216 + $0x150] sm:$0xff] %v1070
        %1135 = vst [vmem:[%s216 + $0x158] sm:$0xff] %v1071
        %1136 = vst [vmem:[%s216 + $0x160] sm:$0xff] %v1072
        %1137 = vst [vmem:[%s216 + $0x168] sm:$0xff] %v1073
        %1138 = vst [vmem:[%s216 + $0x170] sm:$0xff] %v1074
        %1139 = vst [vmem:[%s216 + $0x178] sm:$0xff] %v1075
        %1140 = vst [vmem:[%s216 + $0x180] sm:$0xff] %v1076
        %1141 = vst [vmem:[%s216 + $0x188] sm:$0xff] %v1077
        %1142 = vst [vmem:[%s216 + $0x190] sm:$0xff] %v1078
        %1143 = vst [vmem:[%s216 + $0x198] sm:$0xff] %v1079
        %1144 = vst [vmem:[%s216 + $0x1a0] sm:$0xff] %v1080
        %1145 = vst [vmem:[%s216 + $0x1a8] sm:$0xff] %v1081
        %1146 = vst [vmem:[%s216 + $0x1b0] sm:$0xff] %v1082
        %1147 = vst [vmem:[%s216 + $0x1b8] sm:$0xff] %v1083
        %1148 = vst [vmem:[%s216 + $0x1c0] sm:$0xff] %v1084
        %1149 = vst [vmem:[%s216 + $0x1c8] sm:$0xff] %v1085
        %1150 = vst [vmem:[%s216 + $0x1d0] sm:$0xff] %v1086
        %1151 = vst [vmem:[%s216 + $0x1d8] sm:$0xff] %v1087
        %1152 = vst [vmem:[%s216 + $0x1e0] sm:$0xff] %v1088
        %1153 = vst [vmem:[%s216 + $0x1e8] sm:$0xff] %v1089
        %1154 = vst [vmem:[%s216 + $0x1f0] sm:$0xff] %v1090
        %1155 = vst [vmem:[%s216 + $0x1f8] sm:$0xff] %v1091
        %s1156 = sand.u32 %s97, 1
        %s1157 = scalar_lea.sflag [#allocation4], %s1156
        %s1158 = sand.u32 %s97, 1
        %s1159 = smul.addr %s1158, 512
        %s1160 = scalar_lea.vmem [#allocation8], %s1159
        // Predicated region
        $region45: #{tpu_custom_call.1} parent=31 // pred_check
          %p1161 = pneg %p107
        $region46: #{tpu_custom_call.1} parent=31 // pred_check_branch
          %1163 = sbr.rel (%p1161) target = $region48
        $region47: #{tpu_custom_call.1} parent=31 // pred_region
          %s1164 = smul.u32 64, %s21
          %s1166 = ssub.s32 8192, 8192
          %1167 = vsyncadd %s1157, %s1166
          %s1168 = smul.addr %s1164, 128
          %s1169 = scalar_lea.hbm %s3, %s1168
          %s1170 = sshll.u32 %s1160, 4
          %s1171 = int_to_ptr.vmem [resolvable:$true] %s1170
          %1176 = dma.vmem_to_hbm [thread:$0]  %s1171, 8192, %s1169, %s1157, 128, 128, 8
        $region48: #{tpu_custom_call.1} parent=31 // pred_fallthru
          _
      $region32: #{tpu_custom_call.1} parent=5 // pred_fallthru
        _
      %p1177 = scmp.le.s32.totalorder 2, %s16
      // Predicated region
      $region49: #{tpu_custom_call.1} parent=5 // pred_check
        %p1178 = pneg %p1177
      $region50: #{tpu_custom_call.1} parent=5 // pred_check_branch
        %1180 = sbr.rel (%p1178) target = $region52
      $region51: #{tpu_custom_call.1} parent=5 // pred_region
        %s1181 = ssub.s32 %s16, 2
        // Predicated region
        $region53: #{tpu_custom_call.1} parent=51 // pred_check
          %p1182 = pneg %p113
        $region54: #{tpu_custom_call.1} parent=51 // pred_check_branch
          %1184 = sbr.rel (%p1182) target = $region56
        $region55: #{tpu_custom_call.1} parent=51 // pred_region
          %s1185 = sand.u32 %s98, 1
          %s1186 = scalar_lea.sflag [#allocation4], %s1185
          %s1187 = sand.u32 %s98, 1
          %s1188 = smul.addr %s1187, 512
          %s1189 = scalar_lea.vmem [#allocation8], %s1188
          %1190 = dma.done %s1186, 8192
        $region56: #{tpu_custom_call.1} parent=51 // pred_fallthru
          _
      $region52: #{tpu_custom_call.1} parent=5 // pred_fallthru
        _
    $region6: #{tpu_custom_call.1} parent=1 // loop_footer
      %s20 = sadd.s32 1, %s16
    $region7: #{tpu_custom_call.1} parent=1 // loop_footer_branch
      %15 = sbr.rel target = $region3
    $region8: #{tpu_custom_call.1} parent=1 // loop_exit
      _
    %1191 = vsyncpa [#allocation3], 1
    %s1192 = scalar_lea.sflag [#allocation3], 1
    %1193 = vsyncpa %s1192, 1
    %1194 = vsyncpa [#allocation6], 1
    %1195 = vsyncpa [#allocation4], 1
    %s1196 = scalar_lea.sflag [#allocation4], 1
    %1197 = vsyncpa %s1196, 1

</llo_original>
